<compile_context>
chip_gen: v5e
topology: v5e:2x2
jax: 0.10.0
libtpu: 0.0.40
codegen_flags: <defaults>
</compile_context>

<pallas_src>
import jax
import jax.numpy as jnp
from jax import lax
from jax.experimental import pallas as pl
from jax.experimental.pallas import tpu as pltpu

_EPS = 1e-12  # same eps as torch.nn.functional.normalize


def _nearest_sim_kernel(q_ref, k_ref, invk_ref, o_ref):
    # q_ref    : (tq, C)  query row tile (native dtype; partial tail block OK)
    # k_ref    : (M, C)   full memory bank (grid-invariant, stays resident)
    # invk_ref : (M, 1)   precomputed 1 / max(||item||, eps), f32
    # o_ref    : (1, tq)  lane-dense output row
    q = q_ref[...]                                   # (tq, C)
    k = k_ref[...]                                   # (M,  C)
    inv_k = invk_ref[...]                            # (M,  1) f32

    # Single MXU matmul: s_raw[j, t] = items[j] . q[t]  (contract over C).
    # Transposed orientation keeps every per-query reduction on the lane axis.
    # maxv flows straight into the output, so pin precision for f32 operands.
    prec = (lax.Precision.HIGHEST if q.dtype == jnp.float32
            else lax.Precision.DEFAULT)
    s_raw = lax.dot_general(k, q, (((1,), (1,)), ((), ())),
                            precision=prec,
                            preferred_element_type=jnp.float32)      # (M, tq)

    m = s_raw.shape[0]
    # Nearest item per query = argmax of raw scores (softmax is monotonic);
    # tie-break on the LOWEST index (matches torch.topk), then select that
    # item's inverse norm with a one-hot mask (no gather).
    maxv = jnp.max(s_raw, axis=0, keepdims=True)                     # (1, tq)
    iota = lax.broadcasted_iota(jnp.int32, s_raw.shape, 0)           # (M, tq)
    idx = jnp.min(jnp.where(s_raw == maxv, iota, m), axis=0, keepdims=True)
    onehot = iota == idx                                             # (M, tq)
    inv_k_sel = jnp.sum(jnp.where(onehot, inv_k, 0.0), axis=0,
                        keepdims=True)                               # (1, tq)

    # Query inverse norm: 1/max(||q||, eps) == rsqrt(max(sum(q^2), eps^2)).
    # The sum over C is done with a 1-row matmul so the result lands directly
    # in the (1, tq) lane orientation (no cross-lane transpose needed).
    qf = q.astype(jnp.float32)
    ones_row = jnp.ones((1, qf.shape[1]), jnp.float32)
    ssq = lax.dot_general(ones_row, qf * qf, (((1,), (1,)), ((), ())),
                          precision=lax.Precision.HIGHEST,
                          preferred_element_type=jnp.float32)        # (1, tq)
    inv_q = lax.rsqrt(jnp.maximum(ssq, _EPS * _EPS))                 # (1, tq)

    # cosine(q, items[argmax]) = s_raw[argmax] * inv_q * inv_k[argmax],
    # and s_raw[argmax] == maxv, so no second (normalized) matmul is needed.
    o_ref[...] = (-(maxv * inv_q * inv_k_sel)).astype(o_ref.dtype)


def _vmem_budget_bytes() -> int:
    """Per-generation VMEM budget (requested scoped limit), with headroom."""
    try:
        cap = int(pltpu.get_tpu_info().vmem_capacity_bytes)
    except Exception:
        cap = 64 << 20            # conservative fallback: v7x physical per TC
    return (cap * 3) // 4          # ~96 MiB on v5e/v6e, ~48 MiB on v7x


def _choose_tq(t: int, c: int, m: int, itemsize: int, vmem_budget: int) -> int:
    """Largest lane-aligned query tile that fits the per-generation budget."""
    c_pad = max(128, -(-c // 128) * 128)
    m_pad = max(8, -(-m // 8) * 8)
    # Grid-invariant residents (budget 2 buffers each in case single-buffering
    # is not honored): memory bank + lane-padded (M, 1) inverse-norm column.
    resident = 2 * m_pad * c_pad * itemsize + 2 * m_pad * 128 * 4
    # Per-query-column cost: double-buffered q rows + ~4 live (M, tq) f32/i32
    # temporaries (raw scores, iota, tie-break mask, selected) + output row.
    per_col = 2 * c_pad * itemsize + 4 * m_pad * 4 + 2 * 4
    avail = vmem_budget - resident - (4 << 20)       # extra 4 MiB headroom
    tq = (max(avail, 0) // per_col // 128) * 128
    tq = int(max(128, min(8192, tq)))
    if t < 128:
        return t                   # single full (and rule-legal) block
    return min(tq, (t // 128) * 128)


def nearest_sim(queries: jax.Array, items: jax.Array, *, tq=None) -> jax.Array:
    """queries: (N, L, C), items: (M, C) -> (N, L) float32."""
    n, l, c = queries.shape
    m, c2 = items.shape
    assert c == c2
    t = n * l

    if items.dtype != queries.dtype:
        items = items.astype(queries.dtype)   # matching MXU operand dtypes

    # Flattened query stream is fed UNPADDED (no full-copy jnp.pad): the final
    # partial block's out-of-range lanes yield garbage outputs which the [:t]
    # slice below discards.
    q_flat = queries.reshape(t, c)

    # Grid-invariant inverse item norms, computed once (tiny (M, 1) array).
    inv_k = (1.0 / jnp.maximum(
        jnp.linalg.norm(items.astype(jnp.float32), axis=-1, keepdims=True),
        _EPS)).astype(jnp.float32)                                   # (M, 1)

    vmem_budget = _vmem_budget_bytes()
    if tq is None:
        tq = _choose_tq(t, c, m, queries.dtype.itemsize, vmem_budget)
    grid_steps = pl.cdiv(t, tq)

    # TODO(synk): if the memory bank (M x C) outgrows the per-generation VMEM
    # budget, add a second "arbitrary" grid axis over M-tiles carrying a
    # running max / selected inverse norm in VMEM scratch (online argmax)
    # instead of shrinking tq.

    def build(bank_pipeline_mode):
        bank_kw = ({} if bank_pipeline_mode is None
                   else dict(pipeline_mode=bank_pipeline_mode))
        return pl.pallas_call(
            _nearest_sim_kernel,
            out_shape=jax.ShapeDtypeStruct((1, grid_steps * tq), jnp.float32),
            grid_spec=pltpu.PrefetchScalarGridSpec(
                num_scalar_prefetch=0,
                grid=(grid_steps,),
                in_specs=[
                    # streamed query row tile
                    pl.BlockSpec((tq, c), lambda i: (i, 0)),
                    # resident memory bank + its inverse norms (grid-invariant)
                    pl.BlockSpec((m, c), lambda i: (0, 0), **bank_kw),
                    pl.BlockSpec((m, 1), lambda i: (0, 0), **bank_kw),
                ],
                # rule-clean lane-dense output: sublane dim == full array dim,
                # lane dim a (multiple-of-128) tile -> unmasked vst path.
                out_specs=pl.BlockSpec((1, tq), lambda i: (0, i)),
            ),
            compiler_params=pltpu.CompilerParams(
                dimension_semantics=("parallel",),
                vmem_limit_bytes=int(vmem_budget)),
        )

    try:
        # Single-buffer the grid-invariant bank (constant index_map -> no
        # re-DMA needed), halving its VMEM footprint and freeing room for tq.
        out = build(pl.Buffered(1))(q_flat, items, inv_k)
    except Exception:
        # Fallback if this JAX build rejects single-buffering via pipeline_mode.
        out = build(None)(q_flat, items, inv_k)

    return out[0, :t].reshape(n, l)


def _reference(queries, items):
    # Pure-JAX reference mirroring the PyTorch forward.
    n, l, c = queries.shape
    q = queries.reshape(-1, c)
    score = jax.nn.softmax(q @ items.T, axis=1)
    idx = jnp.argmax(score, axis=1)
    pos = items[idx]
    pos = pos / jnp.maximum(jnp.linalg.norm(pos, axis=-1, keepdims=True), _EPS)
    anc = q / jnp.maximum(jnp.linalg.norm(q, axis=-1, keepdims=True), _EPS)
    sim = -jnp.sum(pos * anc, axis=-1)
    return sim.reshape(n, l)


if __name__ == "__main__":
    key = jax.random.PRNGKey(0)
    kq, ki, kq2 = jax.random.split(key, 3)

    # Small shapes consistent with the module: N x L x C queries, M x C items.
    N, L, C, M = 2, 8, 32, 12
    queries = jax.random.normal(kq, (N, L, C), dtype=jnp.float32)
    items = jax.random.normal(ki, (M, C), dtype=jnp.float32)

    out = nearest_sim(queries, items)
    jax.block_until_ready(out)
    ref = _reference(queries, items)
    assert out.shape == (N, L)
    assert jnp.allclose(out, ref, atol=1e-5, rtol=1e-5)

    # Second check exercising the unpadded partial tail block (T % tq != 0).
    N2, L2 = 3, 100
    queries2 = jax.random.normal(kq2, (N2, L2, C), dtype=jnp.float32)
    out2 = nearest_sim(queries2, items)
    jax.block_until_ready(out2)
    ref2 = _reference(queries2, items)
    assert out2.shape == (N2, L2)
    assert jnp.allclose(out2, ref2, atol=1e-5, rtol=1e-5)

    print("KERNEL_OK")
</pallas_src>

<mosaic_0001>
module attributes {stable_mosaic.version = 11 : i64} {
  func.func @_nearest_sim_kernel(%arg0: i32, %arg1: memref<16x32xf32, #tpu.memory_space<vmem>>, %arg2: memref<12x32xf32, #tpu.memory_space<vmem>>, %arg3: memref<12x1xf32, #tpu.memory_space<vmem>>, %arg4: memref<1x16xf32, #tpu.memory_space<vmem>>) attributes {dimension_semantics = [#tpu.dimension_semantics<parallel>], iteration_bounds = array<i64: 1>, scalar_prefetch = 0 : i64, scratch_operands = 0 : i64, tpu.core_type = #tpu.core_type<tc>, window_params = [{transform_indices = @transform_0, window_bounds = array<i64: 16, 32>}, {pipeline_mode = #tpu.pipeline_mode<synchronous>, transform_indices = @transform_1, window_bounds = array<i64: 12, 32>}, {pipeline_mode = #tpu.pipeline_mode<synchronous>, transform_indices = @transform_2, window_bounds = array<i64: 12, 1>}, {transform_indices = @transform_3, window_bounds = array<i64: 1, 16>}]} {
    %c0 = arith.constant 0 : index
    %c0_0 = arith.constant 0 : index
    %0 = vector.load %arg1[%c0, %c0_0] : memref<16x32xf32, #tpu.memory_space<vmem>>, vector<16x32xf32>
    %c0_1 = arith.constant 0 : index
    %c0_2 = arith.constant 0 : index
    %1 = vector.load %arg2[%c0_1, %c0_2] : memref<12x32xf32, #tpu.memory_space<vmem>>, vector<12x32xf32>
    %c0_3 = arith.constant 0 : index
    %c0_4 = arith.constant 0 : index
    %2 = vector.load %arg3[%c0_3, %c0_4] : memref<12x1xf32, #tpu.memory_space<vmem>>, vector<12x1xf32>
    %cst = arith.constant dense<0.000000e+00> : vector<12x16xf32>
    %3 = tpu.matmul %1, %0, %cst {dimension_numbers = #tpu.dot_dimension_numbers<[1], [1], [0], [0], [0, 0, 1, 0], [], []>, precision = #tpu.contract_precision<fp32>} : vector<12x32xf32>, vector<16x32xf32>, vector<12x16xf32> -> vector<12x16xf32>
    %cst_5 = arith.constant dense<0xFF800000> : vector<16xf32>
    %4 = vector.multi_reduction <maximumf>, %3, %cst_5 [0] : vector<12x16xf32> to vector<16xf32>
    %5 = vector.shape_cast %4 : vector<16xf32> to vector<1x16xf32>
    %6 = tpu.iota {dimensions = array<i32: 0>} : vector<12x16xi32>
    %7 = vector.broadcast %5 : vector<1x16xf32> to vector<12x16xf32>
    %8 = arith.cmpf oeq, %3, %7 : vector<12x16xf32>
    %c12_i32 = arith.constant 12 : i32
    %9 = vector.broadcast %c12_i32 : i32 to vector<12x16xi32>
    %10 = arith.select %8, %6, %9 : vector<12x16xi1>, vector<12x16xi32>
    %cst_6 = arith.constant dense<2147483647> : vector<16xi32>
    %11 = vector.multi_reduction <minsi>, %10, %cst_6 [0] : vector<12x16xi32> to vector<16xi32>
    %12 = vector.shape_cast %11 : vector<16xi32> to vector<1x16xi32>
    %13 = vector.broadcast %12 : vector<1x16xi32> to vector<12x16xi32>
    %14 = arith.cmpi eq, %6, %13 : vector<12x16xi32>
    %cst_7 = arith.constant 0.000000e+00 : f32
    %15 = vector.shape_cast %2 : vector<12x1xf32> to vector<12x1xf32>
    %16 = vector.broadcast %15 : vector<12x1xf32> to vector<12x16xf32>
    %17 = vector.broadcast %cst_7 : f32 to vector<12x16xf32>
    %18 = arith.select %14, %16, %17 : vector<12x16xi1>, vector<12x16xf32>
    %cst_8 = arith.constant dense<0.000000e+00> : vector<16xf32>
    %19 = vector.multi_reduction <add>, %18, %cst_8 [0] : vector<12x16xf32> to vector<16xf32>
    %20 = vector.shape_cast %19 : vector<16xf32> to vector<1x16xf32>
    %cst_9 = arith.constant 1.000000e+00 : f32
    %21 = vector.broadcast %cst_9 : f32 to vector<1x32xf32>
    %22 = arith.mulf %0, %0 : vector<16x32xf32>
    %cst_10 = arith.constant dense<0.000000e+00> : vector<1x16xf32>
    %23 = tpu.matmul %21, %22, %cst_10 {dimension_numbers = #tpu.dot_dimension_numbers<[1], [1], [0], [0], [0, 0, 1, 0], [], []>, precision = #tpu.contract_precision<fp32>} : vector<1x32xf32>, vector<16x32xf32>, vector<1x16xf32> -> vector<1x16xf32>
    %cst_11 = arith.constant 1.000000e-24 : f32
    %24 = vector.broadcast %cst_11 : f32 to vector<1x16xf32>
    %25 = arith.maximumf %23, %24 : vector<1x16xf32>
    %26 = math.rsqrt %25 : vector<1x16xf32>
    %27 = arith.mulf %5, %26 : vector<1x16xf32>
    %28 = arith.mulf %27, %20 : vector<1x16xf32>
    %cst_12 = arith.constant 0.000000e+00 : f32
    %29 = vector.broadcast %cst_12 : f32 to vector<1x16xf32>
    %30 = arith.subf %29, %28 : vector<1x16xf32>
    %c0_13 = arith.constant 0 : index
    %c0_14 = arith.constant 0 : index
    %31 = vector.load %arg4[%c0_13, %c0_14] : memref<1x16xf32, #tpu.memory_space<vmem>>, vector<1x16xf32>
    tpu.vector_store %arg4[%c0_13, %c0_14], %30 {strides = array<i32>} : memref<1x16xf32, #tpu.memory_space<vmem>>, vector<1x16xf32>,
    return
  }
  func.func @transform_0(%arg0: i32) -> (i32, i32) {
    %c0_i32 = arith.constant 0 : i32
    %c0_i32_0 = arith.constant 0 : i32
    return %arg0, %c0_i32 : i32, i32
  }
  func.func @transform_1(%arg0: i32) -> (i32, i32) {
    %c0_i32 = arith.constant 0 : i32
    %c0_i32_0 = arith.constant 0 : i32
    %c0_i32_1 = arith.constant 0 : i32
    return %c0_i32, %c0_i32_0 : i32, i32
  }
  func.func @transform_2(%arg0: i32) -> (i32, i32) {
    %c0_i32 = arith.constant 0 : i32
    %c0_i32_0 = arith.constant 0 : i32
    %c0_i32_1 = arith.constant 0 : i32
    return %c0_i32, %c0_i32_0 : i32, i32
  }
  func.func @transform_3(%arg0: i32) -> (i32, i32) {
    %c0_i32 = arith.constant 0 : i32
    %c0_i32_0 = arith.constant 0 : i32
    return %c0_i32, %arg0 : i32, i32
  }
}

module attributes {stable_mosaic.version = 11 : i64} {
  func.func @_nearest_sim_kernel(%arg0: i32, %arg1: memref<16x32xf32, #tpu.memory_space<vmem>>, %arg2: memref<12x32xf32, #tpu.memory_space<vmem>>, %arg3: memref<12x1xf32, #tpu.memory_space<vmem>>, %arg4: memref<1x16xf32, #tpu.memory_space<vmem>>) attributes {dimension_semantics = [#tpu.dimension_semantics<parallel>], iteration_bounds = array<i64: 1>, scalar_prefetch = 0 : i64, scratch_operands = 0 : i64, tpu.core_type = #tpu.core_type<tc>, window_params = [{transform_indices = @transform_0, window_bounds = array<i64: 16, 32>}, {pipeline_mode = #tpu.pipeline_mode<synchronous>, transform_indices = @transform_1, window_bounds = array<i64: 12, 32>}, {pipeline_mode = #tpu.pipeline_mode<synchronous>, transform_indices = @transform_2, window_bounds = array<i64: 12, 1>}, {transform_indices = @transform_3, window_bounds = array<i64: 1, 16>}]} {
    %c0 = arith.constant 0 : index
    %c0_0 = arith.constant 0 : index
    %0 = vector.load %arg1[%c0, %c0_0] : memref<16x32xf32, #tpu.memory_space<vmem>>, vector<16x32xf32>
    %c0_1 = arith.constant 0 : index
    %c0_2 = arith.constant 0 : index
    %1 = vector.load %arg2[%c0_1, %c0_2] : memref<12x32xf32, #tpu.memory_space<vmem>>, vector<12x32xf32>
    %c0_3 = arith.constant 0 : index
    %c0_4 = arith.constant 0 : index
    %2 = vector.load %arg3[%c0_3, %c0_4] : memref<12x1xf32, #tpu.memory_space<vmem>>, vector<12x1xf32>
    %cst = arith.constant dense<0.000000e+00> : vector<12x16xf32>
    %3 = tpu.matmul %1, %0, %cst {dimension_numbers = #tpu.dot_dimension_numbers<[1], [1], [0], [0], [0, 0, 1, 0], [], []>, precision = #tpu.contract_precision<fp32>} : vector<12x32xf32>, vector<16x32xf32>, vector<12x16xf32> -> vector<12x16xf32>
    %cst_5 = arith.constant dense<0xFF800000> : vector<16xf32>
    %4 = vector.multi_reduction <maximumf>, %3, %cst_5 [0] : vector<12x16xf32> to vector<16xf32>
    %5 = vector.shape_cast %4 : vector<16xf32> to vector<1x16xf32>
    %6 = tpu.iota {dimensions = array<i32: 0>} : vector<12x16xi32>
    %7 = vector.broadcast %5 : vector<1x16xf32> to vector<12x16xf32>
    %8 = arith.cmpf oeq, %3, %7 : vector<12x16xf32>
    %c12_i32 = arith.constant 12 : i32
    %9 = vector.broadcast %c12_i32 : i32 to vector<12x16xi32>
    %10 = arith.select %8, %6, %9 : vector<12x16xi1>, vector<12x16xi32>
    %cst_6 = arith.constant dense<2147483647> : vector<16xi32>
    %11 = vector.multi_reduction <minsi>, %10, %cst_6 [0] : vector<12x16xi32> to vector<16xi32>
    %12 = vector.shape_cast %11 : vector<16xi32> to vector<1x16xi32>
    %13 = vector.broadcast %12 : vector<1x16xi32> to vector<12x16xi32>
    %14 = arith.cmpi eq, %6, %13 : vector<12x16xi32>
    %cst_7 = arith.constant 0.000000e+00 : f32
    %15 = vector.shape_cast %2 : vector<12x1xf32> to vector<12x1xf32>
    %16 = vector.broadcast %15 : vector<12x1xf32> to vector<12x16xf32>
    %17 = vector.broadcast %cst_7 : f32 to vector<12x16xf32>
    %18 = arith.select %14, %16, %17 : vector<12x16xi1>, vector<12x16xf32>
    %cst_8 = arith.constant dense<0.000000e+00> : vector<16xf32>
    %19 = vector.multi_reduction <add>, %18, %cst_8 [0] : vector<12x16xf32> to vector<16xf32>
    %20 = vector.shape_cast %19 : vector<16xf32> to vector<1x16xf32>
    %cst_9 = arith.constant 1.000000e+00 : f32
    %21 = vector.broadcast %cst_9 : f32 to vector<1x32xf32>
    %22 = arith.mulf %0, %0 : vector<16x32xf32>
    %cst_10 = arith.constant dense<0.000000e+00> : vector<1x16xf32>
    %23 = tpu.matmul %21, %22, %cst_10 {dimension_numbers = #tpu.dot_dimension_numbers<[1], [1], [0], [0], [0, 0, 1, 0], [], []>, precision = #tpu.contract_precision<fp32>} : vector<1x32xf32>, vector<16x32xf32>, vector<1x16xf32> -> vector<1x16xf32>
    %cst_11 = arith.constant 1.000000e-24 : f32
    %24 = vector.broadcast %cst_11 : f32 to vector<1x16xf32>
    %25 = arith.maximumf %23, %24 : vector<1x16xf32>
    %26 = math.rsqrt %25 : vector<1x16xf32>
    %27 = arith.mulf %5, %26 : vector<1x16xf32>
    %28 = arith.mulf %27, %20 : vector<1x16xf32>
    %cst_12 = arith.constant 0.000000e+00 : f32
    %29 = vector.broadcast %cst_12 : f32 to vector<1x16xf32>
    %30 = arith.subf %29, %28 : vector<1x16xf32>
    %c0_13 = arith.constant 0 : index
    %c0_14 = arith.constant 0 : index
    %31 = vector.load %arg4[%c0_13, %c0_14] : memref<1x16xf32, #tpu.memory_space<vmem>>, vector<1x16xf32>
    tpu.vector_store %arg4[%c0_13, %c0_14], %30 {strides = array<i32>} : memref<1x16xf32, #tpu.memory_space<vmem>>, vector<1x16xf32>,
    return
  }
  func.func @transform_0(%arg0: i32) -> (i32, i32) {
    %c0_i32 = arith.constant 0 : i32
    %c0_i32_0 = arith.constant 0 : i32
    return %arg0, %c0_i32 : i32, i32
  }
  func.func @transform_1(%arg0: i32) -> (i32, i32) {
    %c0_i32 = arith.constant 0 : i32
    %c0_i32_0 = arith.constant 0 : i32
    %c0_i32_1 = arith.constant 0 : i32
    return %c0_i32, %c0_i32_0 : i32, i32
  }
  func.func @transform_2(%arg0: i32) -> (i32, i32) {
    %c0_i32 = arith.constant 0 : i32
    %c0_i32_0 = arith.constant 0 : i32
    %c0_i32_1 = arith.constant 0 : i32
    return %c0_i32, %c0_i32_0 : i32, i32
  }
  func.func @transform_3(%arg0: i32) -> (i32, i32) {
    %c0_i32 = arith.constant 0 : i32
    %c0_i32_0 = arith.constant 0 : i32
    return %c0_i32, %arg0 : i32, i32
  }
}

</mosaic_0001>

<llo_original>
// kernel: tpu_custom_call.1
$region0: #{tpu_custom_call.1}
  #allocation0 [shape = 'u32[]', space=smem, size = 0x4, offset = 0x4, fixed_abs, tag = 'smem constant byte address 0x4 - core index']
  #allocation1 [shape = 'u32[72,128]{1,0:T(1,128)}', space=vmem, size = 0x9000, scoped, tag = 'internal scratch']
  %s0 = inlined_call_operand.vmem [shape: f32[16,32], index: 0, kind: input, shape index: {}]
  %s1 = inlined_call_operand.hbm [shape: f32[12,32], index: 1, kind: input, shape index: {}]
  %s2 = inlined_call_operand.vmem [shape: f32[12,1], index: 2, kind: input, shape index: {}]
  %s3 = inlined_call_operand.hbm [shape: f32[1,16], index: 3, kind: output, shape index: {}]
  %s4 = sld [smem:[#allocation0]]
  $region26: #{tpu_custom_call.1} parent=0
    _
  %s6 = ssub.s32 1, %s4
  %s7 = scalar_select 0, %s6, %s4
  $region1: #{tpu_custom_call.1} parent=0
    #allocation2 [shape = 'u8[8192]{0}', space=vmem, size = 0x2000, scoped, tag = 'input window, operand 1, single buffered']
    #allocation3 [shape = 's32[1]{0}', space=sflag, size = 0x4, scoped, tag = 'scoped memory for tpu_custom_call.1']
    #allocation4 [shape = 's32[1]{0}', space=sflag, size = 0x4, scoped, tag = 'scoped memory for tpu_custom_call.1']
    #allocation5 [shape = 'u8[512]{0}', space=vmem, size = 0x400, scoped, tag = 'output window, operand 0, single buffered']
    %8 = vsyncpa [#allocation3], 0
    %9 = vsyncpa [#allocation4], 0
    // Predicated region
    $region2: #{tpu_custom_call.1} parent=1 // pred_check
      _
    $region3: #{tpu_custom_call.1} parent=1 // pred_check_branch
      %11 = sbr.rel (0) target = $region5
    $region4: #{tpu_custom_call.1} parent=1 // pred_region
      _
    $region5: #{tpu_custom_call.1} parent=1 // pred_fallthru
      _
    // Predicated region
    $region6: #{tpu_custom_call.1} parent=1 // pred_check
      _
    $region7: #{tpu_custom_call.1} parent=1 // pred_check_branch
      %13 = sbr.rel (0) target = $region9
    $region8: #{tpu_custom_call.1} parent=1 // pred_region
      %15 = vsyncadd [#allocation3], 0
      %s16 = sshll.u32 %s1, 4
      %s17 = int_to_ptr.hbm [resolvable:$true] %s16
      %s18 = sshll.u32 [#allocation2], 4
      %s19 = int_to_ptr.vmem [resolvable:$true] %s18
      %24 = dma.hbm_to_vmem [thread:$0]  %s17, 256, %s19, [#allocation3], 128, 128, 8
    $region9: #{tpu_custom_call.1} parent=1 // pred_fallthru
      _
    // Predicated region
    $region10: #{tpu_custom_call.1} parent=1 // pred_check
      _
    $region11: #{tpu_custom_call.1} parent=1 // pred_check_branch
      %26 = sbr.rel (0) target = $region13
    $region12: #{tpu_custom_call.1} parent=1 // pred_region
      _
    $region13: #{tpu_custom_call.1} parent=1 // pred_fallthru
      _
    // Predicated region
    $region14: #{tpu_custom_call.1} parent=1 // pred_check
      _
    $region15: #{tpu_custom_call.1} parent=1 // pred_check_branch
      %28 = sbr.rel (0) target = $region17
    $region16: #{tpu_custom_call.1} parent=1 // pred_region
      %30 = dma.done [#allocation3], 256
    $region17: #{tpu_custom_call.1} parent=1 // pred_fallthru
      _
    %v31 = vld [vmem:[%s0] sm:$0xff]
    %v32 = vld [vmem:[%s0 + $0x8] sm:$0xff]
    %v33 = vld [vmem:[#allocation2] sm:$0xff]
    %v34 = vld [vmem:[#allocation2 + $0x8] sm:$0xf]
    %v35 = vld [vmem:[%s2] sm:$0xff]
    %v36 = vld [vmem:[%s2 + $0x8] sm:$0xf]
    %vm37 = vcmask 261120
    %v39 = vsel %vm37, %v33, 0
    %v42 = vsel %vm37, %v34, 0
    %v45 = vsel %vm37, %v31, 0
    %v48 = vsel %vm37, %v32, 0
    %50 = vmatpush.xpose.msra.mxu0 0.0
    %51 = vmatpush.xpose.msra.mxu0 0.0
    %52 = vmatpush.xpose.msra.mxu0 0.0
    %53 = vmatpush.xpose.msra.mxu0 0.0
    %54 = vmatpush.xpose.msra.mxu0 0.0
    %55 = vmatpush.xpose.msra.mxu0 0.0
    %56 = vmatpush.xpose.msra.mxu0 0.0
    %57 = vmatpush.xpose.msra.mxu0 0.0
    %58 = vmatpush.xpose.msra.mxu0 0.0
    %59 = vmatpush.xpose.msra.mxu0 0.0
    %60 = vmatpush.xpose.msra.mxu0 0.0
    %61 = vmatpush.xpose.msra.mxu0 0.0
    %62 = vmatpush.xpose.msra.mxu0 0.0
    %63 = vmatpush.xpose.msra.mxu0 0.0
    %v64 = vand.u32 %v48, 4294901760
    %65 = vmatpush.xpose.msra.mxu0 %v64
    %v66 = vand.u32 %v45, 4294901760
    %67 = vmatpush.xpose.msra.mxu0 %v66
    %v68 = vand.u32 %v39, 4294901760
    %v69 = vsub.f32 %v39, %v68
    %v70 = vand.u32 %v69, 4294901760
    %v71 = vsub.f32 %v69, %v70
    %v72 = vand.u32 %v71, 4294901760
    %73 = vmatmul.f32.gmra.mxu0 %v72
    %v74 = vpop.f32.mrf.mxu0
    %v75 = vadd.f32 0.0, %v74
    %v76 = vand.u32 %v42, 4294901760
    %v77 = vsub.f32 %v42, %v76
    %v78 = vand.u32 %v77, 4294901760
    %v79 = vsub.f32 %v77, %v78
    %v80 = vand.u32 %v79, 4294901760
    %81 = vmatmul.f32.gmra.mxu0 %v80
    %v82 = vpop.f32.mrf.mxu0
    %v83 = vadd.f32 0.0, %v82
    %84 = vdwg.mxu0
    %85 = vmatpush.xpose.msra.mxu0 0.0
    %86 = vmatpush.xpose.msra.mxu0 0.0
    %87 = vmatpush.xpose.msra.mxu0 0.0
    %88 = vmatpush.xpose.msra.mxu0 0.0
    %89 = vmatpush.xpose.msra.mxu0 0.0
    %90 = vmatpush.xpose.msra.mxu0 0.0
    %91 = vmatpush.xpose.msra.mxu0 0.0
    %92 = vmatpush.xpose.msra.mxu0 0.0
    %93 = vmatpush.xpose.msra.mxu0 0.0
    %94 = vmatpush.xpose.msra.mxu0 0.0
    %95 = vmatpush.xpose.msra.mxu0 0.0
    %96 = vmatpush.xpose.msra.mxu0 0.0
    %97 = vmatpush.xpose.msra.mxu0 0.0
    %98 = vmatpush.xpose.msra.mxu0 0.0
    %v99 = vand.u32 %v48, 4294901760
    %v100 = vsub.f32 %v48, %v99
    %v101 = vand.u32 %v100, 4294901760
    %v102 = vsub.f32 %v100, %v101
    %v103 = vand.u32 %v102, 4294901760
    %104 = vmatpush.xpose.msra.mxu0 %v103
    %v105 = vand.u32 %v45, 4294901760
    %v106 = vsub.f32 %v45, %v105
    %v107 = vand.u32 %v106, 4294901760
    %v108 = vsub.f32 %v106, %v107
    %v109 = vand.u32 %v108, 4294901760
    %110 = vmatpush.xpose.msra.mxu0 %v109
    %v111 = vand.u32 %v39, 4294901760
    %112 = vmatmul.f32.gmra.mxu0 %v111
    %v113 = vpop.f32.mrf.mxu0
    %v114 = vadd.f32 %v75, %v113
    %v115 = vand.u32 %v42, 4294901760
    %116 = vmatmul.f32.gmra.mxu0 %v115
    %v117 = vpop.f32.mrf.mxu0
    %v118 = vadd.f32 %v83, %v117
    %119 = vdwg.mxu0
    %120 = vmatpush.xpose.msra.mxu0 0.0
    %121 = vmatpush.xpose.msra.mxu0 0.0
    %122 = vmatpush.xpose.msra.mxu0 0.0
    %123 = vmatpush.xpose.msra.mxu0 0.0
    %124 = vmatpush.xpose.msra.mxu0 0.0
    %125 = vmatpush.xpose.msra.mxu0 0.0
    %126 = vmatpush.xpose.msra.mxu0 0.0
    %127 = vmatpush.xpose.msra.mxu0 0.0
    %128 = vmatpush.xpose.msra.mxu0 0.0
    %129 = vmatpush.xpose.msra.mxu0 0.0
    %130 = vmatpush.xpose.msra.mxu0 0.0
    %131 = vmatpush.xpose.msra.mxu0 0.0
    %132 = vmatpush.xpose.msra.mxu0 0.0
    %133 = vmatpush.xpose.msra.mxu0 0.0
    %v134 = vand.u32 %v48, 4294901760
    %v135 = vsub.f32 %v48, %v134
    %136 = vmatpush.xpose.msra.mxu0 %v135
    %v137 = vand.u32 %v45, 4294901760
    %v138 = vsub.f32 %v45, %v137
    %139 = vmatpush.xpose.msra.mxu0 %v138
    %v140 = vand.u32 %v39, 4294901760
    %v141 = vsub.f32 %v39, %v140
    %142 = vmatmul.f32.gmra.mxu0 %v141
    %v143 = vpop.f32.mrf.mxu0
    %v144 = vadd.f32 %v114, %v143
    %v145 = vand.u32 %v42, 4294901760
    %v146 = vsub.f32 %v42, %v145
    %147 = vmatmul.f32.gmra.mxu0 %v146
    %v148 = vpop.f32.mrf.mxu0
    %v149 = vadd.f32 %v118, %v148
    %150 = vdwg.mxu0
    %151 = vmatpush.xpose.msra.mxu0 0.0
    %152 = vmatpush.xpose.msra.mxu0 0.0
    %153 = vmatpush.xpose.msra.mxu0 0.0
    %154 = vmatpush.xpose.msra.mxu0 0.0
    %155 = vmatpush.xpose.msra.mxu0 0.0
    %156 = vmatpush.xpose.msra.mxu0 0.0
    %157 = vmatpush.xpose.msra.mxu0 0.0
    %158 = vmatpush.xpose.msra.mxu0 0.0
    %159 = vmatpush.xpose.msra.mxu0 0.0
    %160 = vmatpush.xpose.msra.mxu0 0.0
    %161 = vmatpush.xpose.msra.mxu0 0.0
    %162 = vmatpush.xpose.msra.mxu0 0.0
    %163 = vmatpush.xpose.msra.mxu0 0.0
    %164 = vmatpush.xpose.msra.mxu0 0.0
    %v165 = vand.u32 %v48, 4294901760
    %166 = vmatpush.xpose.msra.mxu0 %v165
    %v167 = vand.u32 %v45, 4294901760
    %168 = vmatpush.xpose.msra.mxu0 %v167
    %v169 = vand.u32 %v39, 4294901760
    %v170 = vsub.f32 %v39, %v169
    %v171 = vand.u32 %v170, 4294901760
    %172 = vmatmul.f32.gmra.mxu0 %v171
    %v173 = vpop.f32.mrf.mxu0
    %v174 = vadd.f32 %v144, %v173
    %v175 = vand.u32 %v42, 4294901760
    %v176 = vsub.f32 %v42, %v175
    %v177 = vand.u32 %v176, 4294901760
    %178 = vmatmul.f32.gmra.mxu0 %v177
    %v179 = vpop.f32.mrf.mxu0
    %v180 = vadd.f32 %v149, %v179
    %181 = vdwg.mxu0
    %182 = vmatpush.xpose.msra.mxu0 0.0
    %183 = vmatpush.xpose.msra.mxu0 0.0
    %184 = vmatpush.xpose.msra.mxu0 0.0
    %185 = vmatpush.xpose.msra.mxu0 0.0
    %186 = vmatpush.xpose.msra.mxu0 0.0
    %187 = vmatpush.xpose.msra.mxu0 0.0
    %188 = vmatpush.xpose.msra.mxu0 0.0
    %189 = vmatpush.xpose.msra.mxu0 0.0
    %190 = vmatpush.xpose.msra.mxu0 0.0
    %191 = vmatpush.xpose.msra.mxu0 0.0
    %192 = vmatpush.xpose.msra.mxu0 0.0
    %193 = vmatpush.xpose.msra.mxu0 0.0
    %194 = vmatpush.xpose.msra.mxu0 0.0
    %195 = vmatpush.xpose.msra.mxu0 0.0
    %v196 = vand.u32 %v48, 4294901760
    %v197 = vsub.f32 %v48, %v196
    %v198 = vand.u32 %v197, 4294901760
    %199 = vmatpush.xpose.msra.mxu0 %v198
    %v200 = vand.u32 %v45, 4294901760
    %v201 = vsub.f32 %v45, %v200
    %v202 = vand.u32 %v201, 4294901760
    %203 = vmatpush.xpose.msra.mxu0 %v202
    %v204 = vand.u32 %v39, 4294901760
    %205 = vmatmul.f32.gmra.mxu0 %v204
    %v206 = vpop.f32.mrf.mxu0
    %v207 = vadd.f32 %v174, %v206
    %v208 = vand.u32 %v42, 4294901760
    %209 = vmatmul.f32.gmra.mxu0 %v208
    %v210 = vpop.f32.mrf.mxu0
    %v211 = vadd.f32 %v180, %v210
    %212 = vdwg.mxu0
    %213 = vmatpush.xpose.msra.mxu0 0.0
    %214 = vmatpush.xpose.msra.mxu0 0.0
    %215 = vmatpush.xpose.msra.mxu0 0.0
    %216 = vmatpush.xpose.msra.mxu0 0.0
    %217 = vmatpush.xpose.msra.mxu0 0.0
    %218 = vmatpush.xpose.msra.mxu0 0.0
    %219 = vmatpush.xpose.msra.mxu0 0.0
    %220 = vmatpush.xpose.msra.mxu0 0.0
    %221 = vmatpush.xpose.msra.mxu0 0.0
    %222 = vmatpush.xpose.msra.mxu0 0.0
    %223 = vmatpush.xpose.msra.mxu0 0.0
    %224 = vmatpush.xpose.msra.mxu0 0.0
    %225 = vmatpush.xpose.msra.mxu0 0.0
    %226 = vmatpush.xpose.msra.mxu0 0.0
    %v227 = vand.u32 %v48, 4294901760
    %228 = vmatpush.xpose.msra.mxu0 %v227
    %v229 = vand.u32 %v45, 4294901760
    %230 = vmatpush.xpose.msra.mxu0 %v229
    %v231 = vand.u32 %v39, 4294901760
    %232 = vmatmul.f32.gmra.mxu0 %v231
    %v233 = vpop.f32.mrf.mxu0
    %v234 = vadd.f32 %v207, %v233
    %v235 = vand.u32 %v42, 4294901760
    %236 = vmatmul.f32.gmra.mxu0 %v235
    %v237 = vpop.f32.mrf.mxu0
    %v238 = vadd.f32 %v211, %v237
    %239 = vdwg.mxu0
    %vm240 = vcmask 130048
    %v241 = vsel %vm240, %v234, -inf
    %vm242 = vcmask 125952
    %v243 = vsel %vm242, %v238, -inf
    %v244 = vmax.f32 %v241, %v243
    %v245 = vrot.slane %v244, 4
    %v246 = vmax.f32 %v244, %v245
    %v247 = vrot.slane %v246, 2
    %v248 = vmax.f32 %v246, %v247
    %v249 = vrot.slane %v248, 1
    %v250 = vmax.f32 %v248, %v249
    %v251 = vlaneseq
    %v252 = vshrl.u32 %v251, 7
    %v253 = vadd.s32 %v252, 8
    %vm254 = vcmp.eq.f32.partialorder %v234, %v250
    %vm255 = vcmp.eq.f32.partialorder %v238, %v250
    %v256 = vsel %vm254, %v252, 12
    %v257 = vsel %vm255, %v253, 12
    %v258 = vsel %vm240, %v256, 2147483647
    %v259 = vsel %vm242, %v257, 2147483647
    %vm260 = vcmp.lt.s32.totalorder %v258, %v259
    %v261 = vsel %vm260, %v258, %v259
    %v262 = vrot.slane %v261, 4
    %vm263 = vcmp.lt.s32.totalorder %v261, %v262
    %v264 = vsel %vm263, %v261, %v262
    %v265 = vrot.slane %v264, 2
    %vm266 = vcmp.lt.s32.totalorder %v264, %v265
    %v267 = vsel %vm266, %v264, %v265
    %v268 = vrot.slane %v267, 1
    %vm269 = vcmp.lt.s32.totalorder %v267, %v268
    %v270 = vsel %vm269, %v267, %v268
    %vm271 = vcmp.eq.s32.totalorder %v252, %v270
    %vm272 = vcmp.eq.s32.totalorder %v253, %v270
    %274 = vset.pattern.permute.xlu0 0
    %275 = vperm.xlu0 %274, %v35
    %v276 = vpop.permute.xlu0 %275
    %279 = vset.pattern.permute.xlu0 0
    %280 = vperm.xlu0 %279, %v36
    %v281 = vpop.permute.xlu0 %280
    %v283 = vsel %vm271, %v276, 0.0
    %v284 = vsel %vm272, %v281, 0.0
    %v285 = vsel %vm240, %v283, 0.0
    %v286 = vsel %vm242, %v284, 0.0
    %v287 = vadd.f32 %v285, %v286
    %v288 = vrot.slane %v287, 4
    %v289 = vadd.f32 %v287, %v288
    %v290 = vrot.slane %v289, 2
    %v291 = vadd.f32 %v289, %v290
    %v292 = vrot.slane %v291, 1
    %v293 = vadd.f32 %v291, %v292
    %v294 = vmul.f32 %v31, %v31
    %v295 = vmul.f32 %v32, %v32
    %v297 = vsel %vm37, 1.0, 0
    %v300 = vsel %vm37, %v294, 0
    %v303 = vsel %vm37, %v295, 0
    %305 = vmatpush.xpose.msra.mxu0 0.0
    %306 = vmatpush.xpose.msra.mxu0 0.0
    %307 = vmatpush.xpose.msra.mxu0 0.0
    %308 = vmatpush.xpose.msra.mxu0 0.0
    %309 = vmatpush.xpose.msra.mxu0 0.0
    %310 = vmatpush.xpose.msra.mxu0 0.0
    %311 = vmatpush.xpose.msra.mxu0 0.0
    %312 = vmatpush.xpose.msra.mxu0 0.0
    %313 = vmatpush.xpose.msra.mxu0 0.0
    %314 = vmatpush.xpose.msra.mxu0 0.0
    %315 = vmatpush.xpose.msra.mxu0 0.0
    %316 = vmatpush.xpose.msra.mxu0 0.0
    %317 = vmatpush.xpose.msra.mxu0 0.0
    %318 = vmatpush.xpose.msra.mxu0 0.0
    %v319 = vand.u32 %v303, 4294901760
    %320 = vmatpush.xpose.msra.mxu0 %v319
    %v321 = vand.u32 %v300, 4294901760
    %322 = vmatpush.xpose.msra.mxu0 %v321
    %v323 = vand.u32 %v297, 4294901760
    %v324 = vsub.f32 %v297, %v323
    %v325 = vand.u32 %v324, 4294901760
    %v326 = vsub.f32 %v324, %v325
    %v327 = vand.u32 %v326, 4294901760
    %328 = vmatmul.f32.gmra.mxu0 %v327
    %v329 = vpop.f32.mrf.mxu0
    %v330 = vadd.f32 0.0, %v329
    %331 = vdwg.mxu0
    %332 = vmatpush.xpose.msra.mxu0 0.0
    %333 = vmatpush.xpose.msra.mxu0 0.0
    %334 = vmatpush.xpose.msra.mxu0 0.0
    %335 = vmatpush.xpose.msra.mxu0 0.0
    %336 = vmatpush.xpose.msra.mxu0 0.0
    %337 = vmatpush.xpose.msra.mxu0 0.0
    %338 = vmatpush.xpose.msra.mxu0 0.0
    %339 = vmatpush.xpose.msra.mxu0 0.0
    %340 = vmatpush.xpose.msra.mxu0 0.0
    %341 = vmatpush.xpose.msra.mxu0 0.0
    %342 = vmatpush.xpose.msra.mxu0 0.0
    %343 = vmatpush.xpose.msra.mxu0 0.0
    %344 = vmatpush.xpose.msra.mxu0 0.0
    %345 = vmatpush.xpose.msra.mxu0 0.0
    %v346 = vand.u32 %v303, 4294901760
    %v347 = vsub.f32 %v303, %v346
    %v348 = vand.u32 %v347, 4294901760
    %v349 = vsub.f32 %v347, %v348
    %v350 = vand.u32 %v349, 4294901760
    %351 = vmatpush.xpose.msra.mxu0 %v350
    %v352 = vand.u32 %v300, 4294901760
    %v353 = vsub.f32 %v300, %v352
    %v354 = vand.u32 %v353, 4294901760
    %v355 = vsub.f32 %v353, %v354
    %v356 = vand.u32 %v355, 4294901760
    %357 = vmatpush.xpose.msra.mxu0 %v356
    %v358 = vand.u32 %v297, 4294901760
    %359 = vmatmul.f32.gmra.mxu0 %v358
    %v360 = vpop.f32.mrf.mxu0
    %v361 = vadd.f32 %v330, %v360
    %362 = vdwg.mxu0
    %363 = vmatpush.xpose.msra.mxu0 0.0
    %364 = vmatpush.xpose.msra.mxu0 0.0
    %365 = vmatpush.xpose.msra.mxu0 0.0
    %366 = vmatpush.xpose.msra.mxu0 0.0
    %367 = vmatpush.xpose.msra.mxu0 0.0
    %368 = vmatpush.xpose.msra.mxu0 0.0
    %369 = vmatpush.xpose.msra.mxu0 0.0
    %370 = vmatpush.xpose.msra.mxu0 0.0
    %371 = vmatpush.xpose.msra.mxu0 0.0
    %372 = vmatpush.xpose.msra.mxu0 0.0
    %373 = vmatpush.xpose.msra.mxu0 0.0
    %374 = vmatpush.xpose.msra.mxu0 0.0
    %375 = vmatpush.xpose.msra.mxu0 0.0
    %376 = vmatpush.xpose.msra.mxu0 0.0
    %v377 = vand.u32 %v303, 4294901760
    %v378 = vsub.f32 %v303, %v377
    %379 = vmatpush.xpose.msra.mxu0 %v378
    %v380 = vand.u32 %v300, 4294901760
    %v381 = vsub.f32 %v300, %v380
    %382 = vmatpush.xpose.msra.mxu0 %v381
    %v383 = vand.u32 %v297, 4294901760
    %v384 = vsub.f32 %v297, %v383
    %385 = vmatmul.f32.gmra.mxu0 %v384
    %v386 = vpop.f32.mrf.mxu0
    %v387 = vadd.f32 %v361, %v386
    %388 = vdwg.mxu0
    %389 = vmatpush.xpose.msra.mxu0 0.0
    %390 = vmatpush.xpose.msra.mxu0 0.0
    %391 = vmatpush.xpose.msra.mxu0 0.0
    %392 = vmatpush.xpose.msra.mxu0 0.0
    %393 = vmatpush.xpose.msra.mxu0 0.0
    %394 = vmatpush.xpose.msra.mxu0 0.0
    %395 = vmatpush.xpose.msra.mxu0 0.0
    %396 = vmatpush.xpose.msra.mxu0 0.0
    %397 = vmatpush.xpose.msra.mxu0 0.0
    %398 = vmatpush.xpose.msra.mxu0 0.0
    %399 = vmatpush.xpose.msra.mxu0 0.0
    %400 = vmatpush.xpose.msra.mxu0 0.0
    %401 = vmatpush.xpose.msra.mxu0 0.0
    %402 = vmatpush.xpose.msra.mxu0 0.0
    %v403 = vand.u32 %v303, 4294901760
    %404 = vmatpush.xpose.msra.mxu0 %v403
    %v405 = vand.u32 %v300, 4294901760
    %406 = vmatpush.xpose.msra.mxu0 %v405
    %v407 = vand.u32 %v297, 4294901760
    %v408 = vsub.f32 %v297, %v407
    %v409 = vand.u32 %v408, 4294901760
    %410 = vmatmul.f32.gmra.mxu0 %v409
    %v411 = vpop.f32.mrf.mxu0
    %v412 = vadd.f32 %v387, %v411
    %413 = vdwg.mxu0
    %414 = vmatpush.xpose.msra.mxu0 0.0
    %415 = vmatpush.xpose.msra.mxu0 0.0
    %416 = vmatpush.xpose.msra.mxu0 0.0
    %417 = vmatpush.xpose.msra.mxu0 0.0
    %418 = vmatpush.xpose.msra.mxu0 0.0
    %419 = vmatpush.xpose.msra.mxu0 0.0
    %420 = vmatpush.xpose.msra.mxu0 0.0
    %421 = vmatpush.xpose.msra.mxu0 0.0
    %422 = vmatpush.xpose.msra.mxu0 0.0
    %423 = vmatpush.xpose.msra.mxu0 0.0
    %424 = vmatpush.xpose.msra.mxu0 0.0
    %425 = vmatpush.xpose.msra.mxu0 0.0
    %426 = vmatpush.xpose.msra.mxu0 0.0
    %427 = vmatpush.xpose.msra.mxu0 0.0
    %v428 = vand.u32 %v303, 4294901760
    %v429 = vsub.f32 %v303, %v428
    %v430 = vand.u32 %v429, 4294901760
    %431 = vmatpush.xpose.msra.mxu0 %v430
    %v432 = vand.u32 %v300, 4294901760
    %v433 = vsub.f32 %v300, %v432
    %v434 = vand.u32 %v433, 4294901760
    %435 = vmatpush.xpose.msra.mxu0 %v434
    %v436 = vand.u32 %v297, 4294901760
    %437 = vmatmul.f32.gmra.mxu0 %v436
    %v438 = vpop.f32.mrf.mxu0
    %v439 = vadd.f32 %v412, %v438
    %440 = vdwg.mxu0
    %441 = vmatpush.xpose.msra.mxu0 0.0
    %442 = vmatpush.xpose.msra.mxu0 0.0
    %443 = vmatpush.xpose.msra.mxu0 0.0
    %444 = vmatpush.xpose.msra.mxu0 0.0
    %445 = vmatpush.xpose.msra.mxu0 0.0
    %446 = vmatpush.xpose.msra.mxu0 0.0
    %447 = vmatpush.xpose.msra.mxu0 0.0
    %448 = vmatpush.xpose.msra.mxu0 0.0
    %449 = vmatpush.xpose.msra.mxu0 0.0
    %450 = vmatpush.xpose.msra.mxu0 0.0
    %451 = vmatpush.xpose.msra.mxu0 0.0
    %452 = vmatpush.xpose.msra.mxu0 0.0
    %453 = vmatpush.xpose.msra.mxu0 0.0
    %454 = vmatpush.xpose.msra.mxu0 0.0
    %v455 = vand.u32 %v303, 4294901760
    %456 = vmatpush.xpose.msra.mxu0 %v455
    %v457 = vand.u32 %v300, 4294901760
    %458 = vmatpush.xpose.msra.mxu0 %v457
    %v459 = vand.u32 %v297, 4294901760
    %460 = vmatmul.f32.gmra.mxu0 %v459
    %v461 = vpop.f32.mrf.mxu0
    %v462 = vadd.f32 %v439, %v461
    %463 = vdwg.mxu0
    %v464 = vmax.f32 %v462, 1e-24
    %v465 = vrsqrt.pop %v464
    %v466 = vmul.f32 %v465, %v464
    %v467 = vmul.f32 %v466, %v465
    %v468 = vmul.f32 0.5, %v467
    %v469 = vsub.f32 1.5, %v468
    %v470 = vmul.f32 %v465, %v469
    %vm471 = vweird.f32 %v464
    %vm472 = vweird.f32 %v465
    %vm473 = vmor %vm471, %vm472
    %v474 = vsel %vm473, %v465, %v470
    %v475 = vmul.f32 %v250, %v474
    %v476 = vmul.f32 %v475, %v293
    %v477 = vsub.f32 0.0, %v476
    %vm478 = vcmask 122880
    %479 = vst.msk [vmem:[#allocation5] sm:$0x1] %vm478, %v477
    // Predicated region
    $region18: #{tpu_custom_call.1} parent=1 // pred_check
      _
    $region19: #{tpu_custom_call.1} parent=1 // pred_check_branch
      %481 = sbr.rel (0) target = $region21
    $region20: #{tpu_custom_call.1} parent=1 // pred_region
      %483 = vsyncadd [#allocation4], 0
      %s485 = sshll.u32 [#allocation5], 4
      %s486 = int_to_ptr.vmem [resolvable:$true] %s485
      %s487 = sshll.u32 %s3, 4
      %s488 = int_to_ptr.hbm [resolvable:$true] %s487
      %490 = dma.vmem_to_hbm [thread:$0]  %s486, 16, %s488, [#allocation4]
    $region21: #{tpu_custom_call.1} parent=1 // pred_fallthru
      _
    // Predicated region
    $region22: #{tpu_custom_call.1} parent=1 // pred_check
      _
    $region23: #{tpu_custom_call.1} parent=1 // pred_check_branch
      %492 = sbr.rel (0) target = $region25
    $region24: #{tpu_custom_call.1} parent=1 // pred_region
      %494 = dma.done [#allocation4], 16
    $region25: #{tpu_custom_call.1} parent=1 // pred_fallthru
      _
    %495 = vsyncpa [#allocation3], 1
    %496 = vsyncpa [#allocation4], 1

// kernel: tpu_custom_call.1
$region0: #{tpu_custom_call.1}
  #allocation0 [shape = 'u32[]', space=smem, size = 0x4, offset = 0x4, fixed_abs, tag = 'smem constant byte address 0x4 - core index']
  #allocation1 [shape = 'u32[72,128]{1,0:T(1,128)}', space=vmem, size = 0x9000, scoped, tag = 'internal scratch']
  %s0 = inlined_call_operand.vmem [shape: f32[16,32], index: 0, kind: input, shape index: {}]
  %s1 = inlined_call_operand.hbm [shape: f32[12,32], index: 1, kind: input, shape index: {}]
  %s2 = inlined_call_operand.vmem [shape: f32[12,1], index: 2, kind: input, shape index: {}]
  %s3 = inlined_call_operand.hbm [shape: f32[1,16], index: 3, kind: output, shape index: {}]
  %s4 = sld [smem:[#allocation0]]
  $region26: #{tpu_custom_call.1} parent=0
    _
  %s6 = ssub.s32 1, %s4
  %s7 = scalar_select 0, %s6, %s4
  $region1: #{tpu_custom_call.1} parent=0
    #allocation2 [shape = 'u8[8192]{0}', space=vmem, size = 0x2000, scoped, tag = 'input window, operand 1, single buffered']
    #allocation3 [shape = 's32[1]{0}', space=sflag, size = 0x4, scoped, tag = 'scoped memory for tpu_custom_call.1']
    #allocation4 [shape = 's32[1]{0}', space=sflag, size = 0x4, scoped, tag = 'scoped memory for tpu_custom_call.1']
    #allocation5 [shape = 'u8[512]{0}', space=vmem, size = 0x400, scoped, tag = 'output window, operand 0, single buffered']
    %8 = vsyncpa [#allocation3], 0
    %9 = vsyncpa [#allocation4], 0
    // Predicated region
    $region2: #{tpu_custom_call.1} parent=1 // pred_check
      _
    $region3: #{tpu_custom_call.1} parent=1 // pred_check_branch
      %11 = sbr.rel (0) target = $region5
    $region4: #{tpu_custom_call.1} parent=1 // pred_region
      _
    $region5: #{tpu_custom_call.1} parent=1 // pred_fallthru
      _
    // Predicated region
    $region6: #{tpu_custom_call.1} parent=1 // pred_check
      _
    $region7: #{tpu_custom_call.1} parent=1 // pred_check_branch
      %13 = sbr.rel (0) target = $region9
    $region8: #{tpu_custom_call.1} parent=1 // pred_region
      %15 = vsyncadd [#allocation3], 0
      %s16 = sshll.u32 %s1, 4
      %s17 = int_to_ptr.hbm [resolvable:$true] %s16
      %s18 = sshll.u32 [#allocation2], 4
      %s19 = int_to_ptr.vmem [resolvable:$true] %s18
      %24 = dma.hbm_to_vmem [thread:$0]  %s17, 256, %s19, [#allocation3], 128, 128, 8
    $region9: #{tpu_custom_call.1} parent=1 // pred_fallthru
      _
    // Predicated region
    $region10: #{tpu_custom_call.1} parent=1 // pred_check
      _
    $region11: #{tpu_custom_call.1} parent=1 // pred_check_branch
      %26 = sbr.rel (0) target = $region13
    $region12: #{tpu_custom_call.1} parent=1 // pred_region
      _
    $region13: #{tpu_custom_call.1} parent=1 // pred_fallthru
      _
    // Predicated region
    $region14: #{tpu_custom_call.1} parent=1 // pred_check
      _
    $region15: #{tpu_custom_call.1} parent=1 // pred_check_branch
      %28 = sbr.rel (0) target = $region17
    $region16: #{tpu_custom_call.1} parent=1 // pred_region
      %30 = dma.done [#allocation3], 256
    $region17: #{tpu_custom_call.1} parent=1 // pred_fallthru
      _
    %v31 = vld [vmem:[%s0] sm:$0xff]
    %v32 = vld [vmem:[%s0 + $0x8] sm:$0xff]
    %v33 = vld [vmem:[#allocation2] sm:$0xff]
    %v34 = vld [vmem:[#allocation2 + $0x8] sm:$0xf]
    %v35 = vld [vmem:[%s2] sm:$0xff]
    %v36 = vld [vmem:[%s2 + $0x8] sm:$0xf]
    %vm37 = vcmask 261120
    %v39 = vsel %vm37, %v33, 0
    %v42 = vsel %vm37, %v34, 0
    %v45 = vsel %vm37, %v31, 0
    %v48 = vsel %vm37, %v32, 0
    %50 = vmatpush.xpose.msra.mxu0 0.0
    %51 = vmatpush.xpose.msra.mxu0 0.0
    %52 = vmatpush.xpose.msra.mxu0 0.0
    %53 = vmatpush.xpose.msra.mxu0 0.0
    %54 = vmatpush.xpose.msra.mxu0 0.0
    %55 = vmatpush.xpose.msra.mxu0 0.0
    %56 = vmatpush.xpose.msra.mxu0 0.0
    %57 = vmatpush.xpose.msra.mxu0 0.0
    %58 = vmatpush.xpose.msra.mxu0 0.0
    %59 = vmatpush.xpose.msra.mxu0 0.0
    %60 = vmatpush.xpose.msra.mxu0 0.0
    %61 = vmatpush.xpose.msra.mxu0 0.0
    %62 = vmatpush.xpose.msra.mxu0 0.0
    %63 = vmatpush.xpose.msra.mxu0 0.0
    %v64 = vand.u32 %v48, 4294901760
    %65 = vmatpush.xpose.msra.mxu0 %v64
    %v66 = vand.u32 %v45, 4294901760
    %67 = vmatpush.xpose.msra.mxu0 %v66
    %v68 = vand.u32 %v39, 4294901760
    %v69 = vsub.f32 %v39, %v68
    %v70 = vand.u32 %v69, 4294901760
    %v71 = vsub.f32 %v69, %v70
    %v72 = vand.u32 %v71, 4294901760
    %73 = vmatmul.f32.gmra.mxu0 %v72
    %v74 = vpop.f32.mrf.mxu0
    %v75 = vadd.f32 0.0, %v74
    %v76 = vand.u32 %v42, 4294901760
    %v77 = vsub.f32 %v42, %v76
    %v78 = vand.u32 %v77, 4294901760
    %v79 = vsub.f32 %v77, %v78
    %v80 = vand.u32 %v79, 4294901760
    %81 = vmatmul.f32.gmra.mxu0 %v80
    %v82 = vpop.f32.mrf.mxu0
    %v83 = vadd.f32 0.0, %v82
    %84 = vdwg.mxu0
    %85 = vmatpush.xpose.msra.mxu0 0.0
    %86 = vmatpush.xpose.msra.mxu0 0.0
    %87 = vmatpush.xpose.msra.mxu0 0.0
    %88 = vmatpush.xpose.msra.mxu0 0.0
    %89 = vmatpush.xpose.msra.mxu0 0.0
    %90 = vmatpush.xpose.msra.mxu0 0.0
    %91 = vmatpush.xpose.msra.mxu0 0.0
    %92 = vmatpush.xpose.msra.mxu0 0.0
    %93 = vmatpush.xpose.msra.mxu0 0.0
    %94 = vmatpush.xpose.msra.mxu0 0.0
    %95 = vmatpush.xpose.msra.mxu0 0.0
    %96 = vmatpush.xpose.msra.mxu0 0.0
    %97 = vmatpush.xpose.msra.mxu0 0.0
    %98 = vmatpush.xpose.msra.mxu0 0.0
    %v99 = vand.u32 %v48, 4294901760
    %v100 = vsub.f32 %v48, %v99
    %v101 = vand.u32 %v100, 4294901760
    %v102 = vsub.f32 %v100, %v101
    %v103 = vand.u32 %v102, 4294901760
    %104 = vmatpush.xpose.msra.mxu0 %v103
    %v105 = vand.u32 %v45, 4294901760
    %v106 = vsub.f32 %v45, %v105
    %v107 = vand.u32 %v106, 4294901760
    %v108 = vsub.f32 %v106, %v107
    %v109 = vand.u32 %v108, 4294901760
    %110 = vmatpush.xpose.msra.mxu0 %v109
    %v111 = vand.u32 %v39, 4294901760
    %112 = vmatmul.f32.gmra.mxu0 %v111
    %v113 = vpop.f32.mrf.mxu0
    %v114 = vadd.f32 %v75, %v113
    %v115 = vand.u32 %v42, 4294901760
    %116 = vmatmul.f32.gmra.mxu0 %v115
    %v117 = vpop.f32.mrf.mxu0
    %v118 = vadd.f32 %v83, %v117
    %119 = vdwg.mxu0
    %120 = vmatpush.xpose.msra.mxu0 0.0
    %121 = vmatpush.xpose.msra.mxu0 0.0
    %122 = vmatpush.xpose.msra.mxu0 0.0
    %123 = vmatpush.xpose.msra.mxu0 0.0
    %124 = vmatpush.xpose.msra.mxu0 0.0
    %125 = vmatpush.xpose.msra.mxu0 0.0
    %126 = vmatpush.xpose.msra.mxu0 0.0
    %127 = vmatpush.xpose.msra.mxu0 0.0
    %128 = vmatpush.xpose.msra.mxu0 0.0
    %129 = vmatpush.xpose.msra.mxu0 0.0
    %130 = vmatpush.xpose.msra.mxu0 0.0
    %131 = vmatpush.xpose.msra.mxu0 0.0
    %132 = vmatpush.xpose.msra.mxu0 0.0
    %133 = vmatpush.xpose.msra.mxu0 0.0
    %v134 = vand.u32 %v48, 4294901760
    %v135 = vsub.f32 %v48, %v134
    %136 = vmatpush.xpose.msra.mxu0 %v135
    %v137 = vand.u32 %v45, 4294901760
    %v138 = vsub.f32 %v45, %v137
    %139 = vmatpush.xpose.msra.mxu0 %v138
    %v140 = vand.u32 %v39, 4294901760
    %v141 = vsub.f32 %v39, %v140
    %142 = vmatmul.f32.gmra.mxu0 %v141
    %v143 = vpop.f32.mrf.mxu0
    %v144 = vadd.f32 %v114, %v143
    %v145 = vand.u32 %v42, 4294901760
    %v146 = vsub.f32 %v42, %v145
    %147 = vmatmul.f32.gmra.mxu0 %v146
    %v148 = vpop.f32.mrf.mxu0
    %v149 = vadd.f32 %v118, %v148
    %150 = vdwg.mxu0
    %151 = vmatpush.xpose.msra.mxu0 0.0
    %152 = vmatpush.xpose.msra.mxu0 0.0
    %153 = vmatpush.xpose.msra.mxu0 0.0
    %154 = vmatpush.xpose.msra.mxu0 0.0
    %155 = vmatpush.xpose.msra.mxu0 0.0
    %156 = vmatpush.xpose.msra.mxu0 0.0
    %157 = vmatpush.xpose.msra.mxu0 0.0
    %158 = vmatpush.xpose.msra.mxu0 0.0
    %159 = vmatpush.xpose.msra.mxu0 0.0
    %160 = vmatpush.xpose.msra.mxu0 0.0
    %161 = vmatpush.xpose.msra.mxu0 0.0
    %162 = vmatpush.xpose.msra.mxu0 0.0
    %163 = vmatpush.xpose.msra.mxu0 0.0
    %164 = vmatpush.xpose.msra.mxu0 0.0
    %v165 = vand.u32 %v48, 4294901760
    %166 = vmatpush.xpose.msra.mxu0 %v165
    %v167 = vand.u32 %v45, 4294901760
    %168 = vmatpush.xpose.msra.mxu0 %v167
    %v169 = vand.u32 %v39, 4294901760
    %v170 = vsub.f32 %v39, %v169
    %v171 = vand.u32 %v170, 4294901760
    %172 = vmatmul.f32.gmra.mxu0 %v171
    %v173 = vpop.f32.mrf.mxu0
    %v174 = vadd.f32 %v144, %v173
    %v175 = vand.u32 %v42, 4294901760
    %v176 = vsub.f32 %v42, %v175
    %v177 = vand.u32 %v176, 4294901760
    %178 = vmatmul.f32.gmra.mxu0 %v177
    %v179 = vpop.f32.mrf.mxu0
    %v180 = vadd.f32 %v149, %v179
    %181 = vdwg.mxu0
    %182 = vmatpush.xpose.msra.mxu0 0.0
    %183 = vmatpush.xpose.msra.mxu0 0.0
    %184 = vmatpush.xpose.msra.mxu0 0.0
    %185 = vmatpush.xpose.msra.mxu0 0.0
    %186 = vmatpush.xpose.msra.mxu0 0.0
    %187 = vmatpush.xpose.msra.mxu0 0.0
    %188 = vmatpush.xpose.msra.mxu0 0.0
    %189 = vmatpush.xpose.msra.mxu0 0.0
    %190 = vmatpush.xpose.msra.mxu0 0.0
    %191 = vmatpush.xpose.msra.mxu0 0.0
    %192 = vmatpush.xpose.msra.mxu0 0.0
    %193 = vmatpush.xpose.msra.mxu0 0.0
    %194 = vmatpush.xpose.msra.mxu0 0.0
    %195 = vmatpush.xpose.msra.mxu0 0.0
    %v196 = vand.u32 %v48, 4294901760
    %v197 = vsub.f32 %v48, %v196
    %v198 = vand.u32 %v197, 4294901760
    %199 = vmatpush.xpose.msra.mxu0 %v198
    %v200 = vand.u32 %v45, 4294901760
    %v201 = vsub.f32 %v45, %v200
    %v202 = vand.u32 %v201, 4294901760
    %203 = vmatpush.xpose.msra.mxu0 %v202
    %v204 = vand.u32 %v39, 4294901760
    %205 = vmatmul.f32.gmra.mxu0 %v204
    %v206 = vpop.f32.mrf.mxu0
    %v207 = vadd.f32 %v174, %v206
    %v208 = vand.u32 %v42, 4294901760
    %209 = vmatmul.f32.gmra.mxu0 %v208
    %v210 = vpop.f32.mrf.mxu0
    %v211 = vadd.f32 %v180, %v210
    %212 = vdwg.mxu0
    %213 = vmatpush.xpose.msra.mxu0 0.0
    %214 = vmatpush.xpose.msra.mxu0 0.0
    %215 = vmatpush.xpose.msra.mxu0 0.0
    %216 = vmatpush.xpose.msra.mxu0 0.0
    %217 = vmatpush.xpose.msra.mxu0 0.0
    %218 = vmatpush.xpose.msra.mxu0 0.0
    %219 = vmatpush.xpose.msra.mxu0 0.0
    %220 = vmatpush.xpose.msra.mxu0 0.0
    %221 = vmatpush.xpose.msra.mxu0 0.0
    %222 = vmatpush.xpose.msra.mxu0 0.0
    %223 = vmatpush.xpose.msra.mxu0 0.0
    %224 = vmatpush.xpose.msra.mxu0 0.0
    %225 = vmatpush.xpose.msra.mxu0 0.0
    %226 = vmatpush.xpose.msra.mxu0 0.0
    %v227 = vand.u32 %v48, 4294901760
    %228 = vmatpush.xpose.msra.mxu0 %v227
    %v229 = vand.u32 %v45, 4294901760
    %230 = vmatpush.xpose.msra.mxu0 %v229
    %v231 = vand.u32 %v39, 4294901760
    %232 = vmatmul.f32.gmra.mxu0 %v231
    %v233 = vpop.f32.mrf.mxu0
    %v234 = vadd.f32 %v207, %v233
    %v235 = vand.u32 %v42, 4294901760
    %236 = vmatmul.f32.gmra.mxu0 %v235
    %v237 = vpop.f32.mrf.mxu0
    %v238 = vadd.f32 %v211, %v237
    %239 = vdwg.mxu0
    %vm240 = vcmask 130048
    %v241 = vsel %vm240, %v234, -inf
    %vm242 = vcmask 125952
    %v243 = vsel %vm242, %v238, -inf
    %v244 = vmax.f32 %v241, %v243
    %v245 = vrot.slane %v244, 4
    %v246 = vmax.f32 %v244, %v245
    %v247 = vrot.slane %v246, 2
    %v248 = vmax.f32 %v246, %v247
    %v249 = vrot.slane %v248, 1
    %v250 = vmax.f32 %v248, %v249
    %v251 = vlaneseq
    %v252 = vshrl.u32 %v251, 7
    %v253 = vadd.s32 %v252, 8
    %vm254 = vcmp.eq.f32.partialorder %v234, %v250
    %vm255 = vcmp.eq.f32.partialorder %v238, %v250
    %v256 = vsel %vm254, %v252, 12
    %v257 = vsel %vm255, %v253, 12
    %v258 = vsel %vm240, %v256, 2147483647
    %v259 = vsel %vm242, %v257, 2147483647
    %vm260 = vcmp.lt.s32.totalorder %v258, %v259
    %v261 = vsel %vm260, %v258, %v259
    %v262 = vrot.slane %v261, 4
    %vm263 = vcmp.lt.s32.totalorder %v261, %v262
    %v264 = vsel %vm263, %v261, %v262
    %v265 = vrot.slane %v264, 2
    %vm266 = vcmp.lt.s32.totalorder %v264, %v265
    %v267 = vsel %vm266, %v264, %v265
    %v268 = vrot.slane %v267, 1
    %vm269 = vcmp.lt.s32.totalorder %v267, %v268
    %v270 = vsel %vm269, %v267, %v268
    %vm271 = vcmp.eq.s32.totalorder %v252, %v270
    %vm272 = vcmp.eq.s32.totalorder %v253, %v270
    %274 = vset.pattern.permute.xlu0 0
    %275 = vperm.xlu0 %274, %v35
    %v276 = vpop.permute.xlu0 %275
    %279 = vset.pattern.permute.xlu0 0
    %280 = vperm.xlu0 %279, %v36
    %v281 = vpop.permute.xlu0 %280
    %v283 = vsel %vm271, %v276, 0.0
    %v284 = vsel %vm272, %v281, 0.0
    %v285 = vsel %vm240, %v283, 0.0
    %v286 = vsel %vm242, %v284, 0.0
    %v287 = vadd.f32 %v285, %v286
    %v288 = vrot.slane %v287, 4
    %v289 = vadd.f32 %v287, %v288
    %v290 = vrot.slane %v289, 2
    %v291 = vadd.f32 %v289, %v290
    %v292 = vrot.slane %v291, 1
    %v293 = vadd.f32 %v291, %v292
    %v294 = vmul.f32 %v31, %v31
    %v295 = vmul.f32 %v32, %v32
    %v297 = vsel %vm37, 1.0, 0
    %v300 = vsel %vm37, %v294, 0
    %v303 = vsel %vm37, %v295, 0
    %305 = vmatpush.xpose.msra.mxu0 0.0
    %306 = vmatpush.xpose.msra.mxu0 0.0
    %307 = vmatpush.xpose.msra.mxu0 0.0
    %308 = vmatpush.xpose.msra.mxu0 0.0
    %309 = vmatpush.xpose.msra.mxu0 0.0
    %310 = vmatpush.xpose.msra.mxu0 0.0
    %311 = vmatpush.xpose.msra.mxu0 0.0
    %312 = vmatpush.xpose.msra.mxu0 0.0
    %313 = vmatpush.xpose.msra.mxu0 0.0
    %314 = vmatpush.xpose.msra.mxu0 0.0
    %315 = vmatpush.xpose.msra.mxu0 0.0
    %316 = vmatpush.xpose.msra.mxu0 0.0
    %317 = vmatpush.xpose.msra.mxu0 0.0
    %318 = vmatpush.xpose.msra.mxu0 0.0
    %v319 = vand.u32 %v303, 4294901760
    %320 = vmatpush.xpose.msra.mxu0 %v319
    %v321 = vand.u32 %v300, 4294901760
    %322 = vmatpush.xpose.msra.mxu0 %v321
    %v323 = vand.u32 %v297, 4294901760
    %v324 = vsub.f32 %v297, %v323
    %v325 = vand.u32 %v324, 4294901760
    %v326 = vsub.f32 %v324, %v325
    %v327 = vand.u32 %v326, 4294901760
    %328 = vmatmul.f32.gmra.mxu0 %v327
    %v329 = vpop.f32.mrf.mxu0
    %v330 = vadd.f32 0.0, %v329
    %331 = vdwg.mxu0
    %332 = vmatpush.xpose.msra.mxu0 0.0
    %333 = vmatpush.xpose.msra.mxu0 0.0
    %334 = vmatpush.xpose.msra.mxu0 0.0
    %335 = vmatpush.xpose.msra.mxu0 0.0
    %336 = vmatpush.xpose.msra.mxu0 0.0
    %337 = vmatpush.xpose.msra.mxu0 0.0
    %338 = vmatpush.xpose.msra.mxu0 0.0
    %339 = vmatpush.xpose.msra.mxu0 0.0
    %340 = vmatpush.xpose.msra.mxu0 0.0
    %341 = vmatpush.xpose.msra.mxu0 0.0
    %342 = vmatpush.xpose.msra.mxu0 0.0
    %343 = vmatpush.xpose.msra.mxu0 0.0
    %344 = vmatpush.xpose.msra.mxu0 0.0
    %345 = vmatpush.xpose.msra.mxu0 0.0
    %v346 = vand.u32 %v303, 4294901760
    %v347 = vsub.f32 %v303, %v346
    %v348 = vand.u32 %v347, 4294901760
    %v349 = vsub.f32 %v347, %v348
    %v350 = vand.u32 %v349, 4294901760
    %351 = vmatpush.xpose.msra.mxu0 %v350
    %v352 = vand.u32 %v300, 4294901760
    %v353 = vsub.f32 %v300, %v352
    %v354 = vand.u32 %v353, 4294901760
    %v355 = vsub.f32 %v353, %v354
    %v356 = vand.u32 %v355, 4294901760
    %357 = vmatpush.xpose.msra.mxu0 %v356
    %v358 = vand.u32 %v297, 4294901760
    %359 = vmatmul.f32.gmra.mxu0 %v358
    %v360 = vpop.f32.mrf.mxu0
    %v361 = vadd.f32 %v330, %v360
    %362 = vdwg.mxu0
    %363 = vmatpush.xpose.msra.mxu0 0.0
    %364 = vmatpush.xpose.msra.mxu0 0.0
    %365 = vmatpush.xpose.msra.mxu0 0.0
    %366 = vmatpush.xpose.msra.mxu0 0.0
    %367 = vmatpush.xpose.msra.mxu0 0.0
    %368 = vmatpush.xpose.msra.mxu0 0.0
    %369 = vmatpush.xpose.msra.mxu0 0.0
    %370 = vmatpush.xpose.msra.mxu0 0.0
    %371 = vmatpush.xpose.msra.mxu0 0.0
    %372 = vmatpush.xpose.msra.mxu0 0.0
    %373 = vmatpush.xpose.msra.mxu0 0.0
    %374 = vmatpush.xpose.msra.mxu0 0.0
    %375 = vmatpush.xpose.msra.mxu0 0.0
    %376 = vmatpush.xpose.msra.mxu0 0.0
    %v377 = vand.u32 %v303, 4294901760
    %v378 = vsub.f32 %v303, %v377
    %379 = vmatpush.xpose.msra.mxu0 %v378
    %v380 = vand.u32 %v300, 4294901760
    %v381 = vsub.f32 %v300, %v380
    %382 = vmatpush.xpose.msra.mxu0 %v381
    %v383 = vand.u32 %v297, 4294901760
    %v384 = vsub.f32 %v297, %v383
    %385 = vmatmul.f32.gmra.mxu0 %v384
    %v386 = vpop.f32.mrf.mxu0
    %v387 = vadd.f32 %v361, %v386
    %388 = vdwg.mxu0
    %389 = vmatpush.xpose.msra.mxu0 0.0
    %390 = vmatpush.xpose.msra.mxu0 0.0
    %391 = vmatpush.xpose.msra.mxu0 0.0
    %392 = vmatpush.xpose.msra.mxu0 0.0
    %393 = vmatpush.xpose.msra.mxu0 0.0
    %394 = vmatpush.xpose.msra.mxu0 0.0
    %395 = vmatpush.xpose.msra.mxu0 0.0
    %396 = vmatpush.xpose.msra.mxu0 0.0
    %397 = vmatpush.xpose.msra.mxu0 0.0
    %398 = vmatpush.xpose.msra.mxu0 0.0
    %399 = vmatpush.xpose.msra.mxu0 0.0
    %400 = vmatpush.xpose.msra.mxu0 0.0
    %401 = vmatpush.xpose.msra.mxu0 0.0
    %402 = vmatpush.xpose.msra.mxu0 0.0
    %v403 = vand.u32 %v303, 4294901760
    %404 = vmatpush.xpose.msra.mxu0 %v403
    %v405 = vand.u32 %v300, 4294901760
    %406 = vmatpush.xpose.msra.mxu0 %v405
    %v407 = vand.u32 %v297, 4294901760
    %v408 = vsub.f32 %v297, %v407
    %v409 = vand.u32 %v408, 4294901760
    %410 = vmatmul.f32.gmra.mxu0 %v409
    %v411 = vpop.f32.mrf.mxu0
    %v412 = vadd.f32 %v387, %v411
    %413 = vdwg.mxu0
    %414 = vmatpush.xpose.msra.mxu0 0.0
    %415 = vmatpush.xpose.msra.mxu0 0.0
    %416 = vmatpush.xpose.msra.mxu0 0.0
    %417 = vmatpush.xpose.msra.mxu0 0.0
    %418 = vmatpush.xpose.msra.mxu0 0.0
    %419 = vmatpush.xpose.msra.mxu0 0.0
    %420 = vmatpush.xpose.msra.mxu0 0.0
    %421 = vmatpush.xpose.msra.mxu0 0.0
    %422 = vmatpush.xpose.msra.mxu0 0.0
    %423 = vmatpush.xpose.msra.mxu0 0.0
    %424 = vmatpush.xpose.msra.mxu0 0.0
    %425 = vmatpush.xpose.msra.mxu0 0.0
    %426 = vmatpush.xpose.msra.mxu0 0.0
    %427 = vmatpush.xpose.msra.mxu0 0.0
    %v428 = vand.u32 %v303, 4294901760
    %v429 = vsub.f32 %v303, %v428
    %v430 = vand.u32 %v429, 4294901760
    %431 = vmatpush.xpose.msra.mxu0 %v430
    %v432 = vand.u32 %v300, 4294901760
    %v433 = vsub.f32 %v300, %v432
    %v434 = vand.u32 %v433, 4294901760
    %435 = vmatpush.xpose.msra.mxu0 %v434
    %v436 = vand.u32 %v297, 4294901760
    %437 = vmatmul.f32.gmra.mxu0 %v436
    %v438 = vpop.f32.mrf.mxu0
    %v439 = vadd.f32 %v412, %v438
    %440 = vdwg.mxu0
    %441 = vmatpush.xpose.msra.mxu0 0.0
    %442 = vmatpush.xpose.msra.mxu0 0.0
    %443 = vmatpush.xpose.msra.mxu0 0.0
    %444 = vmatpush.xpose.msra.mxu0 0.0
    %445 = vmatpush.xpose.msra.mxu0 0.0
    %446 = vmatpush.xpose.msra.mxu0 0.0
    %447 = vmatpush.xpose.msra.mxu0 0.0
    %448 = vmatpush.xpose.msra.mxu0 0.0
    %449 = vmatpush.xpose.msra.mxu0 0.0
    %450 = vmatpush.xpose.msra.mxu0 0.0
    %451 = vmatpush.xpose.msra.mxu0 0.0
    %452 = vmatpush.xpose.msra.mxu0 0.0
    %453 = vmatpush.xpose.msra.mxu0 0.0
    %454 = vmatpush.xpose.msra.mxu0 0.0
    %v455 = vand.u32 %v303, 4294901760
    %456 = vmatpush.xpose.msra.mxu0 %v455
    %v457 = vand.u32 %v300, 4294901760
    %458 = vmatpush.xpose.msra.mxu0 %v457
    %v459 = vand.u32 %v297, 4294901760
    %460 = vmatmul.f32.gmra.mxu0 %v459
    %v461 = vpop.f32.mrf.mxu0
    %v462 = vadd.f32 %v439, %v461
    %463 = vdwg.mxu0
    %v464 = vmax.f32 %v462, 1e-24
    %v465 = vrsqrt.pop %v464
    %v466 = vmul.f32 %v465, %v464
    %v467 = vmul.f32 %v466, %v465
    %v468 = vmul.f32 0.5, %v467
    %v469 = vsub.f32 1.5, %v468
    %v470 = vmul.f32 %v465, %v469
    %vm471 = vweird.f32 %v464
    %vm472 = vweird.f32 %v465
    %vm473 = vmor %vm471, %vm472
    %v474 = vsel %vm473, %v465, %v470
    %v475 = vmul.f32 %v250, %v474
    %v476 = vmul.f32 %v475, %v293
    %v477 = vsub.f32 0.0, %v476
    %vm478 = vcmask 122880
    %479 = vst.msk [vmem:[#allocation5] sm:$0x1] %vm478, %v477
    // Predicated region
    $region18: #{tpu_custom_call.1} parent=1 // pred_check
      _
    $region19: #{tpu_custom_call.1} parent=1 // pred_check_branch
      %481 = sbr.rel (0) target = $region21
    $region20: #{tpu_custom_call.1} parent=1 // pred_region
      %483 = vsyncadd [#allocation4], 0
      %s485 = sshll.u32 [#allocation5], 4
      %s486 = int_to_ptr.vmem [resolvable:$true] %s485
      %s487 = sshll.u32 %s3, 4
      %s488 = int_to_ptr.hbm [resolvable:$true] %s487
      %490 = dma.vmem_to_hbm [thread:$0]  %s486, 16, %s488, [#allocation4]
    $region21: #{tpu_custom_call.1} parent=1 // pred_fallthru
      _
    // Predicated region
    $region22: #{tpu_custom_call.1} parent=1 // pred_check
      _
    $region23: #{tpu_custom_call.1} parent=1 // pred_check_branch
      %492 = sbr.rel (0) target = $region25
    $region24: #{tpu_custom_call.1} parent=1 // pred_region
      %494 = dma.done [#allocation4], 16
    $region25: #{tpu_custom_call.1} parent=1 // pred_fallthru
      _
    %495 = vsyncpa [#allocation3], 1
    %496 = vsyncpa [#allocation4], 1

</llo_original>
